<compile_context>
chip_gen: v6e
topology: v6e:2x2x1
jax: 0.10.0
libtpu: 0.0.40
codegen_flags: <defaults>
</compile_context>

<pallas_src>
import functools

import jax
import jax.numpy as jnp
import numpy as np
from jax.experimental import pallas as pl
from jax.experimental.pallas import tpu as pltpu


# ----------------------------------------------------------------------------
# Fused kernel: gcn (aggregate -> project) + BN1 + ReLU + tcn + BN2 + residual + ReLU
# ----------------------------------------------------------------------------
def st_gcn_fused_kernel(x_ref, acat_ref, wcat_ref, wres_ref, wtcat_ref,
                        bn1b_ref, finb_ref, o_ref, *, T, V, K, Kt):
    # x_ref:     (1, Cin+1, TV)  bf16, lane-dense, last row is all-ones (carries conv biases)
    # acat_ref:  (TV, K*TV)      bf16, columns k*TV:(k+1)*TV = I_T (kron) A_k
    # wcat_ref:  (Cout, K*(Cin+1)) bf16, BN1-scaled gcn weights + per-k bias column
    # wres_ref:  (Cout, Cin+1)   bf16, BNr-scaled residual 1x1 conv (+ bias column)
    # wtcat_ref: (Cout, Kt*Cout) bf16, BN2-scaled temporal taps, side by side
    # bn1b_ref:  (Cout, 1)       f32, BN1 shift
    # finb_ref:  (Cout, 1)       f32, BN2 shift + BN2-scaled tcn bias + BNr shift
    # o_ref:     (1, Cout, TV)   f32
    TV = T * V
    Cout = o_ref.shape[1]
    pad = (Kt - 1) // 2

    x = x_ref[0]                                             # (Cin+1, TV)

    # --- Graph branch: aggregate FIRST (Cin+1 rows < Cout), one wide matmul -----------
    xa = jnp.dot(x, acat_ref[...],
                 preferred_element_type=jnp.float32).astype(jnp.bfloat16)   # (Cin+1, K*TV)

    # Stack the K aggregated copies along sublanes -> the K-sum becomes part of ONE
    # projection contraction of length K*(Cin+1).
    stacked = jnp.concatenate([xa[:, k * TV:(k + 1) * TV] for k in range(K)],
                              axis=0)                        # (K*(Cin+1), TV)
    g = jnp.dot(wcat_ref[...], stacked,
                preferred_element_type=jnp.float32)          # (Cout, TV), BN1-scale folded

    # --- Residual 1x1 conv (BNr scale folded; its bias rides the ones-row of x) -------
    r = jnp.dot(wres_ref[...], x, preferred_element_type=jnp.float32)       # (Cout, TV)

    # --- BN1 shift + ReLU ---------------------------------------------------------------
    h = jnp.maximum(g + bn1b_ref[...], 0.0).astype(jnp.bfloat16)            # (Cout, TV)

    # --- Temporal conv (Kt,1): lane shifts of h (zero padded at the T boundary) ---------
    #     folded into ONE matmul with a Kt*Cout contraction.  No shift matmuls, no
    #     (TV)^2 shift operands; the data movement happens on XLU/VALU slots.
    parts = []
    for dt in range(Kt):                                     # static, tiny (Kt == 3)
        d = dt - pad                                         # temporal offset of this tap
        if d == 0:
            parts.append(h)
        elif d > 0:
            parts.append(jnp.concatenate(
                [h[:, d * V:], jnp.zeros((Cout, d * V), jnp.bfloat16)], axis=1))
        else:
            parts.append(jnp.concatenate(
                [jnp.zeros((Cout, -d * V), jnp.bfloat16), h[:, :TV + d * V]], axis=1))
    hs = jnp.concatenate(parts, axis=0)                      # (Kt*Cout, TV)
    y = jnp.dot(wtcat_ref[...], hs,
                preferred_element_type=jnp.float32)          # (Cout, TV), BN2-scale folded

    # --- add residual + remaining per-channel shifts, final ReLU ------------------------
    o_ref[0] = jnp.maximum(y + r + finb_ref[...], 0.0)


# ----------------------------------------------------------------------------
# Host-side glue: BN folding, A_cat / stacked weights, pallas_call plumbing
# ----------------------------------------------------------------------------
def _const_spec(arr):
    nd = arr.ndim
    return pl.BlockSpec(arr.shape, lambda n, _nd=nd: (0,) * _nd)


def fold_bn(gamma, beta, mean, var, eps=1e-5):
    scale = gamma / jnp.sqrt(var + eps)
    shift = beta - mean * scale
    return scale, shift


def st_gcn_block_forward(x_nctv, A, P):
    """x_nctv: (N, Cin, T, V) float32 (PyTorch NCHW). Returns ((N, Cout, T, V), A)."""
    N, Cin, T, V = x_nctv.shape
    K, Cout, _ = P['gcn_w'].shape
    Kt = P['tcn_w'].shape[0]
    TV = T * V

    s1, b1 = fold_bn(*P['bn1'])
    s2, b2 = fold_bn(*P['bn2'])
    sr, br = fold_bn(*P['bnr'])

    # Lane-dense x with an appended ones-row (carries both conv biases through the matmuls).
    x_flat = x_nctv.reshape(N, Cin, TV)
    x_aug = jnp.concatenate([x_flat, jnp.ones((N, 1, TV), x_flat.dtype)], axis=1)
    x_aug = x_aug.astype(jnp.bfloat16)                       # (N, Cin+1, TV)

    # Block-diagonal adjacency, all K branches side by side: A_cat[i, k*TV+j] = (I_T kron A_k)[i, j].
    eyeT = jnp.eye(T, dtype=jnp.float32)
    A_blk = jnp.einsum('ts,kvw->ktvsw', eyeT, A).reshape(K, TV, TV)
    A_cat = A_blk.transpose(1, 0, 2).reshape(TV, K * TV).astype(jnp.bfloat16)

    # Projection weights: BN1 scale folded; the extra column per k carries the gcn conv bias
    # (it multiplies the aggregated ones-row, i.e. the column sums of A_k).
    w_gcn = s1[None, :, None] * P['gcn_w']                   # (K, Cout, Cin)
    b_gcn = (s1[None, :] * P['gcn_b'])[:, :, None]           # (K, Cout, 1)
    W_cat = jnp.concatenate([w_gcn, b_gcn], axis=2)          # (K, Cout, Cin+1)
    W_cat = W_cat.transpose(1, 0, 2).reshape(Cout, K * (Cin + 1)).astype(jnp.bfloat16)

    # Residual 1x1 conv: BNr scale folded, conv bias in the ones-row column.
    w_res = jnp.concatenate([sr[:, None] * P['res_w'], (sr * P['res_b'])[:, None]],
                            axis=1).astype(jnp.bfloat16)     # (Cout, Cin+1)

    # Temporal taps: BN2 scale folded, all Kt taps side by side -> one in-kernel matmul.
    Wt_cat = (s2[None, :, None] * P['tcn_w']).transpose(1, 0, 2)
    Wt_cat = Wt_cat.reshape(Cout, Kt * Cout).astype(jnp.bfloat16)

    # Per-channel shifts only (broadcast along lanes in-kernel; nothing tiled over TV).
    bn1_shift = b1[:, None].astype(jnp.float32)              # (Cout, 1)
    finbias = (s2 * P['tcn_b'] + b2 + br)[:, None].astype(jnp.float32)   # (Cout, 1)

    kernel = functools.partial(st_gcn_fused_kernel, T=T, V=V, K=K, Kt=Kt)

    # NOTE: the constant operands keep the same block index across the grid, so Pallas does
    # not re-copy them per step; at these sizes the extra double-buffer VMEM is negligible.
    out_flat = pl.pallas_call(
        kernel,
        out_shape=jax.ShapeDtypeStruct((N, Cout, TV), jnp.float32),
        grid=(N,),
        in_specs=[
            pl.BlockSpec((1, Cin + 1, TV), lambda n: (n, 0, 0)),
            _const_spec(A_cat), _const_spec(W_cat), _const_spec(w_res),
            _const_spec(Wt_cat), _const_spec(bn1_shift), _const_spec(finbias),
        ],
        out_specs=pl.BlockSpec((1, Cout, TV), lambda n: (n, 0, 0)),
        compiler_params=pltpu.CompilerParams(dimension_semantics=("parallel",)),
    )(x_aug, A_cat, W_cat, w_res, Wt_cat, bn1_shift, finbias)

    return out_flat.reshape(N, Cout, T, V), A


# ----------------------------------------------------------------------------
# Pure-JAX reference (NCHW, f32) for verification
# ----------------------------------------------------------------------------
def reference_forward(x, A, P, eps=1e-5):
    W, b = P['gcn_w'], P['gcn_b']
    y = jnp.einsum('koc,nctv->nkotv', W, x) + b[None, :, :, None, None]
    g = jnp.einsum('nkotv,kvw->notw', y, A)

    def bn(z, gm, bt, mn, vr):
        return ((z - mn[None, :, None, None]) /
                jnp.sqrt(vr[None, :, None, None] + eps) *
                gm[None, :, None, None] + bt[None, :, None, None])

    h = jax.nn.relu(bn(g, *P['bn1']))
    Kt = P['tcn_w'].shape[0]
    pad = (Kt - 1) // 2
    T = x.shape[2]
    hp = jnp.pad(h, ((0, 0), (0, 0), (pad, pad), (0, 0)))
    y2 = sum(jnp.einsum('oc,nctv->notv', P['tcn_w'][dt], hp[:, :, dt:dt + T, :])
             for dt in range(Kt))
    y2 = bn(y2 + P['tcn_b'][None, :, None, None], *P['bn2'])
    r = jnp.einsum('oc,nctv->notv', P['res_w'], x) + P['res_b'][None, :, None, None]
    r = bn(r, *P['bnr'])
    return jax.nn.relu(y2 + r), A


# ----------------------------------------------------------------------------
if __name__ == "__main__":
    # Small shapes: N=2, Cin=8, Cout=16, T=8, V=16 -> T*V = 128 (lane-dense),
    # kernel_size = (Kt=3 temporal, K=2 spatial), stride=1, conv residual.
    N, Cin, Cout, T, V = 2, 8, 16, 8, 16
    Kt, K = 3, 2

    key = jax.random.PRNGKey(0)
    ks = jax.random.split(key, 20)
    nrm = lambda k, s: (0.1 * jax.random.normal(k, s)).astype(jnp.float32)
    uni = lambda k, s: jax.random.uniform(k, s, jnp.float32, 0.5, 1.5)

    def make_bn(k):
        k1, k2, k3, k4 = jax.random.split(k, 4)
        return (1.0 + nrm(k1, (Cout,)), nrm(k2, (Cout,)),
                nrm(k3, (Cout,)), uni(k4, (Cout,)))

    P = {
        'gcn_w': nrm(ks[0], (K, Cout, Cin)),     # Conv2d(Cin, K*Cout, 1) weight, reshaped
        'gcn_b': nrm(ks[1], (K, Cout)),
        'tcn_w': nrm(ks[2], (Kt, Cout, Cout)),   # Conv2d(Cout, Cout, (Kt,1)) weight, (tap,out,in)
        'tcn_b': nrm(ks[3], (Cout,)),
        'res_w': nrm(ks[4], (Cout, Cin)),        # residual 1x1 conv
        'res_b': nrm(ks[5], (Cout,)),
        'bn1': make_bn(ks[6]),
        'bn2': make_bn(ks[7]),
        'bnr': make_bn(ks[8]),
    }

    x = jax.random.normal(ks[10], (N, Cin, T, V), jnp.float32)
    A = jax.random.uniform(ks[11], (K, V, V), jnp.float32)

    out, A_out = st_gcn_block_forward(x, A, P)
    out = jax.block_until_ready(out)

    ref, _ = reference_forward(x, A, P)
    # bf16 matmul operands (f32 accumulation) -> relaxed tolerance vs the f32 reference.
    np.testing.assert_allclose(np.asarray(out), np.asarray(ref), rtol=3e-2, atol=3e-2)

    print("KERNEL_OK")
</pallas_src>

<mosaic_0001>
module attributes {stable_mosaic.version = 11 : i64} {
  func.func @st_gcn_fused_kernel(%arg0: i32, %arg1: memref<1x9x128xbf16, #tpu.memory_space<vmem>>, %arg2: memref<128x256xbf16, #tpu.memory_space<vmem>>, %arg3: memref<16x18xbf16, #tpu.memory_space<vmem>>, %arg4: memref<16x9xbf16, #tpu.memory_space<vmem>>, %arg5: memref<16x48xbf16, #tpu.memory_space<vmem>>, %arg6: memref<16x1xf32, #tpu.memory_space<vmem>>, %arg7: memref<16x1xf32, #tpu.memory_space<vmem>>, %arg8: memref<1x16x128xf32, #tpu.memory_space<vmem>>) attributes {dimension_semantics = [#tpu.dimension_semantics<parallel>], iteration_bounds = array<i64: 2>, scalar_prefetch = 0 : i64, scratch_operands = 0 : i64, tpu.core_type = #tpu.core_type<tc>, window_params = [{transform_indices = @transform_0, window_bounds = array<i64: 1, 9, 128>}, {pipeline_mode = #tpu.pipeline_mode<synchronous>, transform_indices = @transform_1, window_bounds = array<i64: 128, 256>}, {pipeline_mode = #tpu.pipeline_mode<synchronous>, transform_indices = @transform_2, window_bounds = array<i64: 16, 18>}, {pipeline_mode = #tpu.pipeline_mode<synchronous>, transform_indices = @transform_3, window_bounds = array<i64: 16, 9>}, {pipeline_mode = #tpu.pipeline_mode<synchronous>, transform_indices = @transform_4, window_bounds = array<i64: 16, 48>}, {pipeline_mode = #tpu.pipeline_mode<synchronous>, transform_indices = @transform_5, window_bounds = array<i64: 16, 1>}, {pipeline_mode = #tpu.pipeline_mode<synchronous>, transform_indices = @transform_6, window_bounds = array<i64: 16, 1>}, {transform_indices = @transform_7, window_bounds = array<i64: 1, 16, 128>}]} {
    %c0 = arith.constant 0 : index
    %c0_0 = arith.constant 0 : index
    %c0_1 = arith.constant 0 : index
    %0 = vector.load %arg1[%c0, %c0_0, %c0_1] : memref<1x9x128xbf16, #tpu.memory_space<vmem>>, vector<1x9x128xbf16>
    %1 = vector.shape_cast %0 : vector<1x9x128xbf16> to vector<9x128xbf16>
    %c0_2 = arith.constant 0 : index
    %c0_3 = arith.constant 0 : index
    %2 = vector.load %arg2[%c0_2, %c0_3] : memref<128x256xbf16, #tpu.memory_space<vmem>>, vector<128x256xbf16>
    %cst = arith.constant dense<0.000000e+00> : vector<9x256xf32>
    %3 = tpu.matmul %1, %2, %cst {dimension_numbers = #tpu.dot_dimension_numbers<[1], [0], [0], [1], [0, 0, 1, 1], [], []>} : vector<9x128xbf16>, vector<128x256xbf16>, vector<9x256xf32> -> vector<9x256xf32>
    %4 = arith.truncf %3 : vector<9x256xf32> to vector<9x256xbf16>
    %5 = vector.extract_strided_slice %4 {offsets = [0, 0], sizes = [9, 128], strides = [1, 1]} : vector<9x256xbf16> to vector<9x128xbf16>
    %6 = vector.extract_strided_slice %4 {offsets = [0, 128], sizes = [9, 128], strides = [1, 1]} : vector<9x256xbf16> to vector<9x128xbf16>
    %7 = tpu.concatenate %5, %6 in 0 : vector<9x128xbf16>, vector<9x128xbf16> -> vector<18x128xbf16>
    %c0_4 = arith.constant 0 : index
    %c0_5 = arith.constant 0 : index
    %8 = vector.load %arg3[%c0_4, %c0_5] : memref<16x18xbf16, #tpu.memory_space<vmem>>, vector<16x18xbf16>
    %cst_6 = arith.constant dense<0.000000e+00> : vector<16x128xf32>
    %9 = tpu.matmul %8, %7, %cst_6 {dimension_numbers = #tpu.dot_dimension_numbers<[1], [0], [0], [1], [0, 0, 1, 1], [], []>} : vector<16x18xbf16>, vector<18x128xbf16>, vector<16x128xf32> -> vector<16x128xf32>
    %c0_7 = arith.constant 0 : index
    %c0_8 = arith.constant 0 : index
    %10 = vector.load %arg4[%c0_7, %c0_8] : memref<16x9xbf16, #tpu.memory_space<vmem>>, vector<16x9xbf16>
    %cst_9 = arith.constant dense<0.000000e+00> : vector<16x128xf32>
    %11 = tpu.matmul %10, %1, %cst_9 {dimension_numbers = #tpu.dot_dimension_numbers<[1], [0], [0], [1], [0, 0, 1, 1], [], []>} : vector<16x9xbf16>, vector<9x128xbf16>, vector<16x128xf32> -> vector<16x128xf32>
    %c0_10 = arith.constant 0 : index
    %c0_11 = arith.constant 0 : index
    %12 = vector.load %arg6[%c0_10, %c0_11] : memref<16x1xf32, #tpu.memory_space<vmem>>, vector<16x1xf32>
    %13 = vector.broadcast %12 : vector<16x1xf32> to vector<16x128xf32>
    %14 = arith.addf %9, %13 : vector<16x128xf32>
    %cst_12 = arith.constant 0.000000e+00 : f32
    %15 = vector.broadcast %cst_12 : f32 to vector<16x128xf32>
    %16 = arith.maximumf %14, %15 : vector<16x128xf32>
    %17 = arith.truncf %16 : vector<16x128xf32> to vector<16x128xbf16>
    %cst_13 = arith.constant 0.000000e+00 : bf16
    %18 = vector.broadcast %cst_13 : bf16 to vector<16x16xbf16>
    %19 = vector.extract_strided_slice %17 {offsets = [0, 0], sizes = [16, 112], strides = [1, 1]} : vector<16x128xbf16> to vector<16x112xbf16>
    %20 = tpu.concatenate %18, %19 in 1 : vector<16x16xbf16>, vector<16x112xbf16> -> vector<16x128xbf16>
    %21 = vector.extract_strided_slice %17 {offsets = [0, 16], sizes = [16, 112], strides = [1, 1]} : vector<16x128xbf16> to vector<16x112xbf16>
    %cst_14 = arith.constant 0.000000e+00 : bf16
    %22 = vector.broadcast %cst_14 : bf16 to vector<16x16xbf16>
    %23 = tpu.concatenate %21, %22 in 1 : vector<16x112xbf16>, vector<16x16xbf16> -> vector<16x128xbf16>
    %24 = tpu.concatenate %20, %17, %23 in 0 : vector<16x128xbf16>, vector<16x128xbf16>, vector<16x128xbf16> -> vector<48x128xbf16>
    %c0_15 = arith.constant 0 : index
    %c0_16 = arith.constant 0 : index
    %25 = vector.load %arg5[%c0_15, %c0_16] : memref<16x48xbf16, #tpu.memory_space<vmem>>, vector<16x48xbf16>
    %cst_17 = arith.constant dense<0.000000e+00> : vector<16x128xf32>
    %26 = tpu.matmul %25, %24, %cst_17 {dimension_numbers = #tpu.dot_dimension_numbers<[1], [0], [0], [1], [0, 0, 1, 1], [], []>} : vector<16x48xbf16>, vector<48x128xbf16>, vector<16x128xf32> -> vector<16x128xf32>
    %27 = arith.addf %26, %11 : vector<16x128xf32>
    %c0_18 = arith.constant 0 : index
    %c0_19 = arith.constant 0 : index
    %28 = vector.load %arg7[%c0_18, %c0_19] : memref<16x1xf32, #tpu.memory_space<vmem>>, vector<16x1xf32>
    %29 = vector.broadcast %28 : vector<16x1xf32> to vector<16x128xf32>
    %30 = arith.addf %27, %29 : vector<16x128xf32>
    %cst_20 = arith.constant 0.000000e+00 : f32
    %31 = vector.broadcast %cst_20 : f32 to vector<16x128xf32>
    %32 = arith.maximumf %30, %31 : vector<16x128xf32>
    %c0_21 = arith.constant 0 : index
    %c0_22 = arith.constant 0 : index
    %c0_23 = arith.constant 0 : index
    %33 = vector.load %arg8[%c0_21, %c0_22, %c0_23] : memref<1x16x128xf32, #tpu.memory_space<vmem>>, vector<1x16x128xf32>
    %34 = vector.shape_cast %33 : vector<1x16x128xf32> to vector<16x128xf32>
    %35 = vector.shape_cast %32 : vector<16x128xf32> to vector<1x16x128xf32>
    tpu.vector_store %arg8[%c0_21, %c0_22, %c0_23], %35 {strides = array<i32>} : memref<1x16x128xf32, #tpu.memory_space<vmem>>, vector<1x16x128xf32>,
    return
  }
  func.func @transform_0(%arg0: i32) -> (i32, i32, i32) {
    %c0_i32 = arith.constant 0 : i32
    %c0_i32_0 = arith.constant 0 : i32
    %c0_i32_1 = arith.constant 0 : i32
    return %arg0, %c0_i32, %c0_i32_0 : i32, i32, i32
  }
  func.func @transform_1(%arg0: i32) -> (i32, i32) {
    %c0_i32 = arith.constant 0 : i32
    %c0_i32_0 = arith.constant 0 : i32
    %c0_i32_1 = arith.constant 0 : i32
    return %c0_i32, %c0_i32_0 : i32, i32
  }
  func.func @transform_2(%arg0: i32) -> (i32, i32) {
    %c0_i32 = arith.constant 0 : i32
    %c0_i32_0 = arith.constant 0 : i32
    %c0_i32_1 = arith.constant 0 : i32
    return %c0_i32, %c0_i32_0 : i32, i32
  }
  func.func @transform_3(%arg0: i32) -> (i32, i32) {
    %c0_i32 = arith.constant 0 : i32
    %c0_i32_0 = arith.constant 0 : i32
    %c0_i32_1 = arith.constant 0 : i32
    return %c0_i32, %c0_i32_0 : i32, i32
  }
  func.func @transform_4(%arg0: i32) -> (i32, i32) {
    %c0_i32 = arith.constant 0 : i32
    %c0_i32_0 = arith.constant 0 : i32
    %c0_i32_1 = arith.constant 0 : i32
    return %c0_i32, %c0_i32_0 : i32, i32
  }
  func.func @transform_5(%arg0: i32) -> (i32, i32) {
    %c0_i32 = arith.constant 0 : i32
    %c0_i32_0 = arith.constant 0 : i32
    %c0_i32_1 = arith.constant 0 : i32
    return %c0_i32, %c0_i32_0 : i32, i32
  }
  func.func @transform_6(%arg0: i32) -> (i32, i32) {
    %c0_i32 = arith.constant 0 : i32
    %c0_i32_0 = arith.constant 0 : i32
    %c0_i32_1 = arith.constant 0 : i32
    return %c0_i32, %c0_i32_0 : i32, i32
  }
  func.func @transform_7(%arg0: i32) -> (i32, i32, i32) {
    %c0_i32 = arith.constant 0 : i32
    %c0_i32_0 = arith.constant 0 : i32
    %c0_i32_1 = arith.constant 0 : i32
    return %arg0, %c0_i32, %c0_i32_0 : i32, i32, i32
  }
}

</mosaic_0001>

<llo_original>
// kernel: tpu_custom_call.1
$region0: #{tpu_custom_call.1}
  #allocation0 [shape = 'u32[]', space=smem, size = 0x4, offset = 0x4, fixed_abs, tag = 'smem constant byte address 0x4 - core index']
  #allocation1 [shape = 'u32[144,128]{1,0:T(1,128)}', space=vmem, size = 0x12000, scoped, tag = 'internal scratch']
  %s0 = inlined_call_operand.vmem [shape: bf16[2,9,128], index: 0, kind: input, shape index: {}]
  %s1 = inlined_call_operand.hbm [shape: bf16[128,256], index: 1, kind: input, shape index: {}]
  %s2 = inlined_call_operand.vmem [shape: bf16[16,18], index: 2, kind: input, shape index: {}]
  %s3 = inlined_call_operand.vmem [shape: bf16[16,9], index: 3, kind: input, shape index: {}]
  %s4 = inlined_call_operand.vmem [shape: bf16[16,48], index: 4, kind: input, shape index: {}]
  %s5 = inlined_call_operand.vmem [shape: f32[16,1], index: 5, kind: input, shape index: {}]
  %s6 = inlined_call_operand.vmem [shape: f32[16,1], index: 6, kind: input, shape index: {}]
  %s7 = inlined_call_operand.hbm [shape: f32[2,16,128], index: 7, kind: output, shape index: {}]
  %s8 = sld [smem:[#allocation0]]
  $region65: #{tpu_custom_call.1} parent=0
    _
  %s10 = ssub.s32 1, %s8
  %s11 = scalar_select 0, %s10, %s8
  $region1: #{tpu_custom_call.1} parent=0
    #allocation2 [shape = 'u8[65536]{0}', space=vmem, size = 0x10000, scoped, tag = 'input window, operand 1, single buffered']
    #allocation3 [shape = 's32[2]{0}', space=sflag, size = 0x8, scoped, tag = 'scoped memory for tpu_custom_call.1']
    #allocation4 [shape = 's32[2]{0}', space=sflag, size = 0x8, scoped, tag = 'scoped memory for tpu_custom_call.1']
    #allocation5 [shape = 'u8[16384]{0}', space=vmem, size = 0x4000, scoped, tag = 'output window, operand 0']
    %12 = vsyncpa [#allocation3], 0
    %13 = vsyncpa [#allocation4], 0
    %s14 = scalar_lea.sflag [#allocation4], 1
    %15 = vsyncpa %s14, 0
    loop: start=0, step=1, limit=4
    $region2: #{tpu_custom_call.1} parent=1 // loop_pre_header
      _
    $region3: #{tpu_custom_call.1} parent=1 // loop_header
      %s17 = sphi 0, %s21
      %p18 = scmp.ge.s32.totalorder %s17, 4
      %s27 = sphi 0, %s29
      %s30 = sphi 0, %s27
      %s31 = sphi 0, %s30
      %s47 = sphi 0, %s31
      %s51 = sphi 0, %s51
      %s53 = sphi 0, %s51
      %s54 = sphi 0, %s53
      %s68 = sphi 0, %s54
      %s72 = sphi 0, %s72
      %s74 = sphi 0, %s72
      %s75 = sphi 0, %s74
      %s89 = sphi 0, %s75
      %s93 = sphi 0, %s93
      %s95 = sphi 0, %s93
      %s96 = sphi 0, %s95
      %s110 = sphi 0, %s96
      %s114 = sphi 0, %s114
      %s116 = sphi 0, %s114
      %s117 = sphi 0, %s116
      %s131 = sphi 0, %s117
      %s135 = sphi 0, %s135
      %s137 = sphi 0, %s135
      %s138 = sphi 0, %s137
      %s152 = sphi 0, %s138
      %s156 = sphi 0, %s156
      %s158 = sphi 0, %s156
      %s159 = sphi 0, %s158
      %s173 = sphi 0, %s159
      %s179 = sphi 0, %s181
      %s182 = sphi 0, %s179
      %s183 = sphi 0, %s182
      %s199 = sphi 0, %s183
    $region4: #{tpu_custom_call.1} parent=1 // loop_header_branch
      %20 = sbr.rel (%p18) target = $region8
    $region5: #{tpu_custom_call.1} parent=1 // loop_body
      %s22 = ssub.s32 %s17, 1
      %s23 = ssub.s32 %s17, 2
      %s24 = sadd.s32 %s17, 1
      %s25 = ssub.s32 %s17, %s24
      %p26 = scmp.eq.s32.totalorder %s25, 0
      %s28 = sadd.s32 %s27, 1
      %s29 = scalar_select %p26, %s27, %s28
      %p32 = pneg %p26
      %p33 = scmp.eq.s32.totalorder %s17, 1
      %p34 = por %p32, %p33
      %p35 = scmp.ne.s32.totalorder %s27, %s30
      %p36 = scmp.eq.s32.totalorder %s17, 0
      %p37 = por %p35, %p36
      %p38 = scmp.ne.s32.totalorder %s27, %s30
      %p39 = scmp.eq.s32.totalorder %s22, 1
      %p40 = por %p38, %p39
      %p41 = scmp.ne.s32.totalorder %s30, %s31
      %p42 = scmp.eq.s32.totalorder %s22, 0
      %p43 = por %p41, %p42
      %p44 = scmp.ne.s32.totalorder %s30, %s31
      %p45 = scmp.eq.s32.totalorder %s23, 1
      %p46 = por %p44, %p45
      %p48 = scmp.ne.s32.totalorder %s31, %s47
      %p49 = scmp.eq.s32.totalorder %s23, 0
      %p50 = por %p48, %p49
      %s52 = sadd.s32 %s51, 1
      %p55 = scmp.eq.s32.totalorder %s17, 1
      %p56 = scmp.ne.s32.totalorder %s51, %s53
      %p57 = scmp.eq.s32.totalorder %s17, 0
      %p58 = por %p56, %p57
      %p59 = scmp.ne.s32.totalorder %s51, %s53
      %p60 = scmp.eq.s32.totalorder %s22, 1
      %p61 = por %p59, %p60
      %p62 = scmp.ne.s32.totalorder %s53, %s54
      %p63 = scmp.eq.s32.totalorder %s22, 0
      %p64 = por %p62, %p63
      %p65 = scmp.ne.s32.totalorder %s53, %s54
      %p66 = scmp.eq.s32.totalorder %s23, 1
      %p67 = por %p65, %p66
      %p69 = scmp.ne.s32.totalorder %s54, %s68
      %p70 = scmp.eq.s32.totalorder %s23, 0
      %p71 = por %p69, %p70
      %s73 = sadd.s32 %s72, 1
      %p76 = scmp.eq.s32.totalorder %s17, 1
      %p77 = scmp.ne.s32.totalorder %s72, %s74
      %p78 = scmp.eq.s32.totalorder %s17, 0
      %p79 = por %p77, %p78
      %p80 = scmp.ne.s32.totalorder %s72, %s74
      %p81 = scmp.eq.s32.totalorder %s22, 1
      %p82 = por %p80, %p81
      %p83 = scmp.ne.s32.totalorder %s74, %s75
      %p84 = scmp.eq.s32.totalorder %s22, 0
      %p85 = por %p83, %p84
      %p86 = scmp.ne.s32.totalorder %s74, %s75
      %p87 = scmp.eq.s32.totalorder %s23, 1
      %p88 = por %p86, %p87
      %p90 = scmp.ne.s32.totalorder %s75, %s89
      %p91 = scmp.eq.s32.totalorder %s23, 0
      %p92 = por %p90, %p91
      %s94 = sadd.s32 %s93, 1
      %p97 = scmp.eq.s32.totalorder %s17, 1
      %p98 = scmp.ne.s32.totalorder %s93, %s95
      %p99 = scmp.eq.s32.totalorder %s17, 0
      %p100 = por %p98, %p99
      %p101 = scmp.ne.s32.totalorder %s93, %s95
      %p102 = scmp.eq.s32.totalorder %s22, 1
      %p103 = por %p101, %p102
      %p104 = scmp.ne.s32.totalorder %s95, %s96
      %p105 = scmp.eq.s32.totalorder %s22, 0
      %p106 = por %p104, %p105
      %p107 = scmp.ne.s32.totalorder %s95, %s96
      %p108 = scmp.eq.s32.totalorder %s23, 1
      %p109 = por %p107, %p108
      %p111 = scmp.ne.s32.totalorder %s96, %s110
      %p112 = scmp.eq.s32.totalorder %s23, 0
      %p113 = por %p111, %p112
      %s115 = sadd.s32 %s114, 1
      %p118 = scmp.eq.s32.totalorder %s17, 1
      %p119 = scmp.ne.s32.totalorder %s114, %s116
      %p120 = scmp.eq.s32.totalorder %s17, 0
      %p121 = por %p119, %p120
      %p122 = scmp.ne.s32.totalorder %s114, %s116
      %p123 = scmp.eq.s32.totalorder %s22, 1
      %p124 = por %p122, %p123
      %p125 = scmp.ne.s32.totalorder %s116, %s117
      %p126 = scmp.eq.s32.totalorder %s22, 0
      %p127 = por %p125, %p126
      %p128 = scmp.ne.s32.totalorder %s116, %s117
      %p129 = scmp.eq.s32.totalorder %s23, 1
      %p130 = por %p128, %p129
      %p132 = scmp.ne.s32.totalorder %s117, %s131
      %p133 = scmp.eq.s32.totalorder %s23, 0
      %p134 = por %p132, %p133
      %s136 = sadd.s32 %s135, 1
      %p139 = scmp.eq.s32.totalorder %s17, 1
      %p140 = scmp.ne.s32.totalorder %s135, %s137
      %p141 = scmp.eq.s32.totalorder %s17, 0
      %p142 = por %p140, %p141
      %p143 = scmp.ne.s32.totalorder %s135, %s137
      %p144 = scmp.eq.s32.totalorder %s22, 1
      %p145 = por %p143, %p144
      %p146 = scmp.ne.s32.totalorder %s137, %s138
      %p147 = scmp.eq.s32.totalorder %s22, 0
      %p148 = por %p146, %p147
      %p149 = scmp.ne.s32.totalorder %s137, %s138
      %p150 = scmp.eq.s32.totalorder %s23, 1
      %p151 = por %p149, %p150
      %p153 = scmp.ne.s32.totalorder %s138, %s152
      %p154 = scmp.eq.s32.totalorder %s23, 0
      %p155 = por %p153, %p154
      %s157 = sadd.s32 %s156, 1
      %p160 = scmp.eq.s32.totalorder %s17, 1
      %p161 = scmp.ne.s32.totalorder %s156, %s158
      %p162 = scmp.eq.s32.totalorder %s17, 0
      %p163 = por %p161, %p162
      %p164 = scmp.ne.s32.totalorder %s156, %s158
      %p165 = scmp.eq.s32.totalorder %s22, 1
      %p166 = por %p164, %p165
      %p167 = scmp.ne.s32.totalorder %s158, %s159
      %p168 = scmp.eq.s32.totalorder %s22, 0
      %p169 = por %p167, %p168
      %p170 = scmp.ne.s32.totalorder %s158, %s159
      %p171 = scmp.eq.s32.totalorder %s23, 1
      %p172 = por %p170, %p171
      %p174 = scmp.ne.s32.totalorder %s159, %s173
      %p175 = scmp.eq.s32.totalorder %s23, 0
      %p176 = por %p174, %p175
      %s177 = ssub.s32 %s17, %s24
      %p178 = scmp.eq.s32.totalorder %s177, 0
      %s180 = sadd.s32 %s179, 1
      %s181 = scalar_select %p178, %s179, %s180
      %p184 = pneg %p178
      %p185 = scmp.eq.s32.totalorder %s17, 1
      %p186 = por %p184, %p185
      %p187 = scmp.ne.s32.totalorder %s179, %s182
      %p188 = scmp.eq.s32.totalorder %s17, 0
      %p189 = por %p187, %p188
      %p190 = scmp.ne.s32.totalorder %s179, %s182
      %p191 = scmp.eq.s32.totalorder %s22, 1
      %p192 = por %p190, %p191
      %p193 = scmp.ne.s32.totalorder %s182, %s183
      %p194 = scmp.eq.s32.totalorder %s22, 0
      %p195 = por %p193, %p194
      %p196 = scmp.ne.s32.totalorder %s182, %s183
      %p197 = scmp.eq.s32.totalorder %s23, 1
      %p198 = por %p196, %p197
      %p200 = scmp.ne.s32.totalorder %s183, %s199
      %p201 = scmp.eq.s32.totalorder %s23, 0
      %p202 = por %p200, %p201
      %p203 = scmp.le.s32.totalorder 1, %s17
      %p204 = scmp.lt.s32.totalorder %s17, 3
      %p205 = pnand %p203, %p204
      %p206 = pneg %p205
      // Predicated region
      $region9: #{tpu_custom_call.1} parent=5 // pred_check
        _
      $region10: #{tpu_custom_call.1} parent=5 // pred_check_branch
        %208 = sbr.rel (%p205) target = $region12
      $region11: #{tpu_custom_call.1} parent=5 // pred_region
        %s209 = ssub.s32 %s17, 1
        // Predicated region
        $region13: #{tpu_custom_call.1} parent=11 // pred_check
          %p210 = pneg %p64
        $region14: #{tpu_custom_call.1} parent=11 // pred_check_branch
          %212 = sbr.rel (%p210) target = $region16
        $region15: #{tpu_custom_call.1} parent=11 // pred_region
          %s214 = ssub.s32 2048, 2048
          %215 = vsyncadd [#allocation3], %s214
          %s216 = sshll.u32 [#allocation2], 4
          %s217 = int_to_ptr.vmem [resolvable:$true] %s216
          %222 = dma.hbm_to_vmem [thread:$0]  %s1, 2048, %s217, [#allocation3], 128, 128, 8
        $region16: #{tpu_custom_call.1} parent=11 // pred_fallthru
          _
        // Predicated region
        $region17: #{tpu_custom_call.1} parent=11 // pred_check
          %p223 = pneg %p85
        $region18: #{tpu_custom_call.1} parent=11 // pred_check_branch
          %225 = sbr.rel (%p223) target = $region20
        $region19: #{tpu_custom_call.1} parent=11 // pred_region
          _
        $region20: #{tpu_custom_call.1} parent=11 // pred_fallthru
          _
        // Predicated region
        $region21: #{tpu_custom_call.1} parent=11 // pred_check
          %p226 = pneg %p106
        $region22: #{tpu_custom_call.1} parent=11 // pred_check_branch
          %228 = sbr.rel (%p226) target = $region24
        $region23: #{tpu_custom_call.1} parent=11 // pred_region
          _
        $region24: #{tpu_custom_call.1} parent=11 // pred_fallthru
          _
        // Predicated region
        $region25: #{tpu_custom_call.1} parent=11 // pred_check
          %p229 = pneg %p127
        $region26: #{tpu_custom_call.1} parent=11 // pred_check_branch
          %231 = sbr.rel (%p229) target = $region28
        $region27: #{tpu_custom_call.1} parent=11 // pred_region
          _
        $region28: #{tpu_custom_call.1} parent=11 // pred_fallthru
          _
        // Predicated region
        $region29: #{tpu_custom_call.1} parent=11 // pred_check
          %p232 = pneg %p148
        $region30: #{tpu_custom_call.1} parent=11 // pred_check_branch
          %234 = sbr.rel (%p232) target = $region32
        $region31: #{tpu_custom_call.1} parent=11 // pred_region
          _
        $region32: #{tpu_custom_call.1} parent=11 // pred_fallthru
          _
        // Predicated region
        $region33: #{tpu_custom_call.1} parent=11 // pred_check
          %p235 = pneg %p169
        $region34: #{tpu_custom_call.1} parent=11 // pred_check_branch
          %237 = sbr.rel (%p235) target = $region36
        $region35: #{tpu_custom_call.1} parent=11 // pred_region
          _
        $region36: #{tpu_custom_call.1} parent=11 // pred_fallthru
          _
      $region12: #{tpu_custom_call.1} parent=5 // pred_fallthru
        _
      %p238 = scmp.lt.s32.totalorder %s17, 2
      // Predicated region
      $region37: #{tpu_custom_call.1} parent=5 // pred_check
        %p239 = pneg %p238
      $region38: #{tpu_custom_call.1} parent=5 // pred_check_branch
        %241 = sbr.rel (%p239) target = $region40
      $region39: #{tpu_custom_call.1} parent=5 // pred_region
        // Predicated region
        $region41: #{tpu_custom_call.1} parent=39 // pred_check
          %p242 = pneg %p37
        $region42: #{tpu_custom_call.1} parent=39 // pred_check_branch
          %244 = sbr.rel (%p242) target = $region44
        $region43: #{tpu_custom_call.1} parent=39 // pred_region
          %p245 = scmp.lt.s32.totalorder %s17, 1
          %s246 = scalar_select %p245, %s17, 1
          %s247 = smul.addr %s246, 2
          %s248 = smul.addr %s247, 4
          %s249 = scalar_lea.vmem %s0, %s248
        $region44: #{tpu_custom_call.1} parent=39 // pred_fallthru
          _
      $region40: #{tpu_custom_call.1} parent=5 // pred_fallthru
        _
      %p250 = scmp.le.s32.totalorder 1, %s17
      %p251 = scmp.lt.s32.totalorder %s17, 3
      %p252 = pnand %p250, %p251
      %p253 = pneg %p252
      // Predicated region
      $region45: #{tpu_custom_call.1} parent=5 // pred_check
        _
      $region46: #{tpu_custom_call.1} parent=5 // pred_check_branch
        %255 = sbr.rel (%p252) target = $region48
      $region47: #{tpu_custom_call.1} parent=5 // pred_region
        %s256 = ssub.s32 %s17, 1
        // Predicated region
        $region49: #{tpu_custom_call.1} parent=47 // pred_check
          %p257 = pneg %p64
        $region50: #{tpu_custom_call.1} parent=47 // pred_check_branch
          %259 = sbr.rel (%p257) target = $region52
        $region51: #{tpu_custom_call.1} parent=47 // pred_region
          %260 = dma.done [#allocation3], 2048
        $region52: #{tpu_custom_call.1} parent=47 // pred_fallthru
          _
        %p261 = scmp.lt.s32.totalorder %s22, 1
        %s262 = scalar_select %p261, %s22, 1
        %s263 = smul.addr %s262, 2
        %s264 = smul.addr %s263, 4
        %s265 = scalar_lea.vmem %s0, %s264
        %p266 = pneg %p43
        %p267 = pneg %p40
        %p268 = pneg %p64
        %p269 = pneg %p61
        %p270 = pneg %p85
        %p271 = pneg %p82
        %p272 = pneg %p106
        %p273 = pneg %p103
        %p274 = pneg %p127
        %p275 = pneg %p124
        %p276 = pneg %p148
        %p277 = pneg %p145
        %p278 = pneg %p169
        %p279 = pneg %p166
        %p280 = pneg %p195
        %p281 = pneg %p192
        %s282 = sand.u32 %s182, 1
        %s283 = scalar_lea.sflag [#allocation4], %s282
        %s284 = sand.u32 %s182, 1
        %s285 = smul.addr %s284, 16
        %s286 = scalar_lea.vmem [#allocation5], %s285
        %p287 = scmp.lt.s32.totalorder %s22, 1
        %s288 = scalar_select %p287, %s22, 1
        %s289 = smul.addr %s288, 2
        %s290 = smul.addr %s289, 4
        %s291 = scalar_lea.vmem %s0, %s290
        %v293 = vld [vmem:[%s291] sm:$0xf]
        %v294 = vld [vmem:[%s291 + $0x4] sm:$0x1]
        %v295 = vld [vmem:[#allocation2] sm:$0xff]
        %v296 = vld [vmem:[#allocation2 + $0x8] sm:$0xff]
        %v297 = vld [vmem:[#allocation2 + $0x10] sm:$0xff]
        %v298 = vld [vmem:[#allocation2 + $0x18] sm:$0xff]
        %v299 = vld [vmem:[#allocation2 + $0x20] sm:$0xff]
        %v300 = vld [vmem:[#allocation2 + $0x28] sm:$0xff]
        %v301 = vld [vmem:[#allocation2 + $0x30] sm:$0xff]
        %v302 = vld [vmem:[#allocation2 + $0x38] sm:$0xff]
        %v303 = vld [vmem:[#allocation2 + $0x40] sm:$0xff]
        %v304 = vld [vmem:[#allocation2 + $0x48] sm:$0xff]
        %v305 = vld [vmem:[#allocation2 + $0x50] sm:$0xff]
        %v306 = vld [vmem:[#allocation2 + $0x58] sm:$0xff]
        %v307 = vld [vmem:[#allocation2 + $0x60] sm:$0xff]
        %v308 = vld [vmem:[#allocation2 + $0x68] sm:$0xff]
        %v309 = vld [vmem:[#allocation2 + $0x70] sm:$0xff]
        %v310 = vld [vmem:[#allocation2 + $0x78] sm:$0xff]
        %v313 = vunpack.c.l.b16 %v293
        %v314 = vunpack.c.l.b16 %v294
        %v315 = vpack.c.b16 %v314, %v313
        %v333 = vunpack.c.l.b16 %v295
        %v334 = vunpack.c.h.b16 %v295
        %v335 = vunpack.c.l.b16 %v296
        %v336 = vunpack.c.h.b16 %v296
        %v337 = vunpack.c.l.b16 %v297
        %v338 = vunpack.c.h.b16 %v297
        %v339 = vunpack.c.l.b16 %v298
        %v340 = vunpack.c.h.b16 %v298
        %v341 = vunpack.c.l.b16 %v299
        %v342 = vunpack.c.h.b16 %v299
        %v343 = vunpack.c.l.b16 %v300
        %v344 = vunpack.c.h.b16 %v300
        %v345 = vunpack.c.l.b16 %v301
        %v346 = vunpack.c.h.b16 %v301
        %v347 = vunpack.c.l.b16 %v302
        %v348 = vunpack.c.h.b16 %v302
        %v349 = vunpack.c.l.b16 %v303
        %v350 = vunpack.c.h.b16 %v303
        %v351 = vunpack.c.l.b16 %v304
        %v352 = vunpack.c.h.b16 %v304
        %v353 = vunpack.c.l.b16 %v305
        %v354 = vunpack.c.h.b16 %v305
        %v355 = vunpack.c.l.b16 %v306
        %v356 = vunpack.c.h.b16 %v306
        %v357 = vunpack.c.l.b16 %v307
        %v358 = vunpack.c.h.b16 %v307
        %v359 = vunpack.c.l.b16 %v308
        %v360 = vunpack.c.h.b16 %v308
        %v361 = vunpack.c.l.b16 %v309
        %v362 = vunpack.c.h.b16 %v309
        %v363 = vunpack.c.l.b16 %v310
        %v364 = vunpack.c.h.b16 %v310
        %v365 = vpack.c.b16 %v335, %v333
        %v366 = vpack.c.b16 %v336, %v334
        %v367 = vpack.c.b16 %v339, %v337
        %v368 = vpack.c.b16 %v340, %v338
        %v369 = vpack.c.b16 %v343, %v341
        %v370 = vpack.c.b16 %v344, %v342
        %v371 = vpack.c.b16 %v347, %v345
        %v372 = vpack.c.b16 %v348, %v346
        %v373 = vpack.c.b16 %v351, %v349
        %v374 = vpack.c.b16 %v352, %v350
        %v375 = vpack.c.b16 %v355, %v353
        %v376 = vpack.c.b16 %v356, %v354
        %v377 = vpack.c.b16 %v359, %v357
        %v378 = vpack.c.b16 %v360, %v358
        %v379 = vpack.c.b16 %v363, %v361
        %v380 = vpack.c.b16 %v364, %v362
        %397 = vmatprep.subr.bf16.mxu0 %v380
        %398 = vmatpush1.bf16.msra.mxu0 %v379
        %399 = vmatprep.subr.bf16.mxu0 %v378
        %400 = vmatpush1.bf16.msra.mxu0 %v377
        %401 = vmatprep.subr.bf16.mxu0 %v376
        %402 = vmatpush1.bf16.msra.mxu0 %v375
        %403 = vmatprep.subr.bf16.mxu0 %v374
        %404 = vmatpush1.bf16.msra.mxu0 %v373
        %405 = vmatprep.subr.bf16.mxu0 %v372
        %406 = vmatpush1.bf16.msra.mxu0 %v371
        %407 = vmatprep.subr.bf16.mxu0 %v370
        %408 = vmatpush1.bf16.msra.mxu0 %v369
        %409 = vmatprep.subr.bf16.mxu0 %v368
        %410 = vmatpush1.bf16.msra.mxu0 %v367
        %411 = vmatprep.subr.bf16.mxu0 %v366
        %412 = vmatpush1.bf16.msra.mxu0 %v365
        %413 = vmatprep.subr.bf16.mxu0 0
        %414 = vmatpush2.bf16.msra.mxu0 0
        %415 = vmatprep.subr.bf16.mxu0 0
        %416 = vmatpush2.bf16.msra.mxu0 0
        %417 = vmatprep.subr.bf16.mxu0 0
        %418 = vmatpush2.bf16.msra.mxu0 0
        %419 = vmatprep.subr.bf16.mxu0 0
        %420 = vmatpush2.bf16.msra.mxu0 0
        %421 = vmatprep.subr.bf16.mxu0 0
        %422 = vmatpush2.bf16.msra.mxu0 0
        %423 = vmatprep.subr.bf16.mxu0 0
        %424 = vmatpush2.bf16.msra.mxu0 0
        %425 = vmatprep.subr.bf16.mxu0 0
        %426 = vmatpush2.bf16.msra.mxu0 0
        %427 = vmatprep.subr.bf16.mxu0 0
        %428 = vmatpush2.bf16.msra.mxu0 0
        %429 = vmatprep.mubr.bf16.mxu0 0
        %430 = vmatmul.mubr.bf16.gmra.mxu0 %v315
        %v431 = vpop.f32.mrf.mxu0
        %v432 = vadd.f32 0.0, %v431
        %v433 = vpop.f32.mrf.mxu0
        %v434 = vadd.f32 0.0, %v433
        %v435 = vpop.f32.mrf.mxu0
        %v436 = vadd.f32 0.0, %v435
        %v437 = vpop.f32.mrf.mxu0
        %v438 = vadd.f32 0.0, %v437
        %439 = vdwg.mxu0
        %v440 = vpack.c.bf16 %v436, %v432
        %v441 = vpack.c.bf16 %v438, %v434
        %v443 = vshrl.u32 %v441, 16
        %v445 = vrot.slane %v443, 3
        %v446 = vshll.u32 %v441, 16
        %v448 = vrot.slane %v446, 4
        %v449 = vor.u32 %v445, %v448
        %vm451 = vcmask 1044480
        %vm452 = vsmask.f32 4352
        %vm453 = vmand %vm451, %vm452
        %v454 = vsel %vm453, %v440, %v449
        %v455 = vld [vmem:[%s2] sm:$0xf]
        %v456 = vld [vmem:[%s2 + $0x4] sm:$0xf]
        %v457 = vld [vmem:[%s3] sm:$0xf]
        %v458 = vld [vmem:[%s3 + $0x4] sm:$0xf]
        %v461 = vunpack.c.l.b16 %v457
        %v462 = vunpack.c.l.b16 %v458
        %v463 = vpack.c.b16 %v462, %v461
        %vm464 = vcmask 72704
        %v466 = vsel %vm464, %v463, 0
        %vm468 = vcmask 1043456
        %vm469 = vcmask 1044480
        %v470 = vsel %vm468, 4294967295, 65535
        %v471 = vsel %vm469, %v470, 0
        %v473 = vand.u32 %v315, %v471
        %475 = vmatprep.subr.bf16.mxu0 0
        %476 = vmatpush1.bf16.msra.mxu0 0
        %477 = vmatprep.subr.bf16.mxu0 0
        %478 = vmatpush1.bf16.msra.mxu0 0
        %479 = vmatprep.subr.bf16.mxu0 0
        %480 = vmatpush1.bf16.msra.mxu0 0
        %481 = vmatprep.subr.bf16.mxu0 0
        %482 = vmatpush1.bf16.msra.mxu0 0
        %483 = vmatprep.subr.bf16.mxu0 0
        %484 = vmatpush1.bf16.msra.mxu0 0
        %485 = vmatprep.subr.bf16.mxu0 0
        %486 = vmatpush1.bf16.msra.mxu0 0
        %487 = vmatprep.subr.bf16.mxu0 0
        %488 = vmatpush1.bf16.msra.mxu0 0
        %489 = vmatprep.subr.bf16.mxu0 0
        %490 = vmatpush1.bf16.msra.mxu0 %v473
        %491 = vmatprep.subr.bf16.mxu0 0
        %492 = vmatpush2.bf16.msra.mxu0 0
        %493 = vmatprep.subr.bf16.mxu0 0
        %494 = vmatpush2.bf16.msra.mxu0 0
        %495 = vmatprep.subr.bf16.mxu0 0
        %496 = vmatpush2.bf16.msra.mxu0 0
        %497 = vmatprep.subr.bf16.mxu0 0
        %498 = vmatpush2.bf16.msra.mxu0 0
        %499 = vmatprep.subr.bf16.mxu0 0
        %500 = vmatpush2.bf16.msra.mxu0 0
        %501 = vmatprep.subr.bf16.mxu0 0
        %502 = vmatpush2.bf16.msra.mxu0 0
        %503 = vmatprep.subr.bf16.mxu0 0
        %504 = vmatpush2.bf16.msra.mxu0 0
        %505 = vmatprep.subr.bf16.mxu0 0
        %506 = vmatpush2.bf16.msra.mxu0 0
        %507 = vmatprep.mubr.bf16.mxu0 0
        %508 = vmatmul.mubr.bf16.gmra.mxu0 %v466
        %v509 = vpop.f32.mrf.mxu0
        %v510 = vadd.f32 0.0, %v509
        %v511 = vpop.f32.mrf.mxu0
        %v512 = vpop.f32.mrf.mxu0
        %v513 = vadd.f32 0.0, %v512
        %v514 = vpop.f32.mrf.mxu0
        %515 = vdwg.mxu0
        %v516 = vld [vmem:[%s5] sm:$0xff]
        %v517 = vld [vmem:[%s5 + $0x8] sm:$0xff]
        %519 = vset.pattern.permute.xlu0 0
        %520 = vperm.xlu0 %519, %v516
        %v521 = vpop.permute.xlu0 %520
        %524 = vset.pattern.permute.xlu0 0
        %525 = vperm.xlu0 %524, %v517
        %v526 = vpop.permute.xlu0 %525
        %v530 = vunpack.c.l.b16 %v455
        %v531 = vunpack.c.l.b16 %v456
        %v532 = vpack.c.b16 %v531, %v530
        %vm533 = vcmask 146432
        %v535 = vsel %vm533, %v532, 0
        %vm537 = vcmask 1040384
        %v539 = vsel %vm537, %v449, 0
        %541 = vmatprep.subr.bf16.mxu0 0
        %542 = vmatpush1.bf16.msra.mxu0 0
        %543 = vmatprep.subr.bf16.mxu0 0
        %544 = vmatpush1.bf16.msra.mxu0 0
        %545 = vmatprep.subr.bf16.mxu0 0
        %546 = vmatpush1.bf16.msra.mxu0 0
        %547 = vmatprep.subr.bf16.mxu0 0
        %548 = vmatpush1.bf16.msra.mxu0 0
        %549 = vmatprep.subr.bf16.mxu0 0
        %550 = vmatpush1.bf16.msra.mxu0 0
        %551 = vmatprep.subr.bf16.mxu0 0
        %552 = vmatpush1.bf16.msra.mxu0 0
        %553 = vmatprep.subr.bf16.mxu0 0
        %554 = vmatpush1.bf16.msra.mxu0 %v539
        %555 = vmatprep.subr.bf16.mxu0 0
        %556 = vmatpush1.bf16.msra.mxu0 %v454
        %557 = vmatprep.subr.bf16.mxu0 0
        %558 = vmatpush2.bf16.msra.mxu0 0
        %559 = vmatprep.subr.bf16.mxu0 0
        %560 = vmatpush2.bf16.msra.mxu0 0
        %561 = vmatprep.subr.bf16.mxu0 0
        %562 = vmatpush2.bf16.msra.mxu0 0
        %563 = vmatprep.subr.bf16.mxu0 0
        %564 = vmatpush2.bf16.msra.mxu0 0
        %565 = vmatprep.subr.bf16.mxu0 0
        %566 = vmatpush2.bf16.msra.mxu0 0
        %567 = vmatprep.subr.bf16.mxu0 0
        %568 = vmatpush2.bf16.msra.mxu0 0
        %569 = vmatprep.subr.bf16.mxu0 0
        %570 = vmatpush2.bf16.msra.mxu0 0
        %571 = vmatprep.subr.bf16.mxu0 0
        %572 = vmatpush2.bf16.msra.mxu0 0
        %573 = vmatprep.mubr.bf16.mxu0 0
        %574 = vmatmul.mubr.bf16.gmra.mxu0 %v535
        %v575 = vpop.f32.mrf.mxu0
        %v576 = vadd.f32 %v521, %v575
        %v577 = vpop.f32.mrf.mxu0
        %v578 = vpop.f32.mrf.mxu0
        %v579 = vadd.f32 %v526, %v578
        %v580 = vpop.f32.mrf.mxu0
        %581 = vdwg.mxu0
        %v582 = vmax.f32 %v576, 0.0
        %v583 = vmax.f32 %v579, 0.0
        %v584 = vpack.c.bf16 %v583, %v582
        %586 = vrot.lane.b32.xlu0 %v584, 16
        %v587 = vpop.permute.xlu0 %586
        %vm588 = vcmask 130048
        %v591 = vsel %vm588, 0, %v587
        %593 = vrot.lane.b32.xlu0 %v584, 112
        %v594 = vpop.permute.xlu0 %593
        %vm595 = vcmask 916480
        %v597 = vsel %vm595, %v594, 0
        %v599 = vld [vmem:[%s4] sm:$0xf]
        %v600 = vld [vmem:[%s4 + $0x4] sm:$0xf]
        %v603 = vunpack.c.l.b16 %v599
        %v604 = vunpack.c.l.b16 %v600
        %v605 = vpack.c.b16 %v604, %v603
        %vm606 = vcmask 392192
        %v608 = vsel %vm606, %v605, 0
        %610 = vmatprep.subr.bf16.mxu0 0
        %611 = vmatpush1.bf16.msra.mxu0 0
        %612 = vmatprep.subr.bf16.mxu0 0
        %613 = vmatpush1.bf16.msra.mxu0 0
        %614 = vmatprep.subr.bf16.mxu0 0
        %615 = vmatpush1.bf16.msra.mxu0 0
        %616 = vmatprep.subr.bf16.mxu0 0
        %617 = vmatpush1.bf16.msra.mxu0 0
        %618 = vmatprep.subr.bf16.mxu0 0
        %619 = vmatpush1.bf16.msra.mxu0 0
        %620 = vmatprep.subr.bf16.mxu0 0
        %621 = vmatpush1.bf16.msra.mxu0 %v597
        %622 = vmatprep.subr.bf16.mxu0 0
        %623 = vmatpush1.bf16.msra.mxu0 %v584
        %624 = vmatprep.subr.bf16.mxu0 0
        %625 = vmatpush1.bf16.msra.mxu0 %v591
        %626 = vmatprep.subr.bf16.mxu0 0
        %627 = vmatpush2.bf16.msra.mxu0 0
        %628 = vmatprep.subr.bf16.mxu0 0
        %629 = vmatpush2.bf16.msra.mxu0 0
        %630 = vmatprep.subr.bf16.mxu0 0
        %631 = vmatpush2.bf16.msra.mxu0 0
        %632 = vmatprep.subr.bf16.mxu0 0
        %633 = vmatpush2.bf16.msra.mxu0 0
        %634 = vmatprep.subr.bf16.mxu0 0
        %635 = vmatpush2.bf16.msra.mxu0 0
        %636 = vmatprep.subr.bf16.mxu0 0
        %637 = vmatpush2.bf16.msra.mxu0 0
        %638 = vmatprep.subr.bf16.mxu0 0
        %639 = vmatpush2.bf16.msra.mxu0 0
        %640 = vmatprep.subr.bf16.mxu0 0
        %641 = vmatpush2.bf16.msra.mxu0 0
        %642 = vmatprep.mubr.bf16.mxu0 0
        %643 = vmatmul.mubr.bf16.gmra.mxu0 %v608
        %v644 = vpop.f32.mrf.mxu0
        %v645 = vadd.f32 %v510, %v644
        %v646 = vpop.f32.mrf.mxu0
        %v647 = vpop.f32.mrf.mxu0
        %v648 = vadd.f32 %v513, %v647
        %v649 = vpop.f32.mrf.mxu0
        %650 = vdwg.mxu0
        %v651 = vld [vmem:[%s6] sm:$0xff]
        %v652 = vld [vmem:[%s6 + $0x8] sm:$0xff]
        %654 = vset.pattern.permute.xlu0 0
        %655 = vperm.xlu0 %654, %v651
        %v656 = vpop.permute.xlu0 %655
        %659 = vset.pattern.permute.xlu0 0
        %660 = vperm.xlu0 %659, %v652
        %v661 = vpop.permute.xlu0 %660
        %v663 = vadd.f32 %v645, %v656
        %v664 = vadd.f32 %v648, %v661
        %v665 = vmax.f32 %v663, 0.0
        %v666 = vmax.f32 %v664, 0.0
        %667 = vst [vmem:[%s286] sm:$0xff] %v665
        %668 = vst [vmem:[%s286 + $0x8] sm:$0xff] %v666
        %s669 = sand.u32 %s182, 1
        %s670 = scalar_lea.sflag [#allocation4], %s669
        %s671 = sand.u32 %s182, 1
        %s672 = smul.addr %s671, 16
        %s673 = scalar_lea.vmem [#allocation5], %s672
        // Predicated region
        $region53: #{tpu_custom_call.1} parent=47 // pred_check
          %p674 = pneg %p192
        $region54: #{tpu_custom_call.1} parent=47 // pred_check_branch
          %676 = sbr.rel (%p674) target = $region56
        $region55: #{tpu_custom_call.1} parent=47 // pred_region
          %s678 = ssub.s32 256, 256
          %679 = vsyncadd %s670, %s678
          %s680 = smul.addr %s22, 2
          %s681 = smul.addr %s680, 128
          %s682 = scalar_lea.hbm %s7, %s681
          %s683 = sshll.u32 %s673, 4
          %s684 = int_to_ptr.vmem [resolvable:$true] %s683
          %689 = dma.vmem_to_hbm [thread:$0]  %s684, 256, %s682, %s670, 128, 128, 8
        $region56: #{tpu_custom_call.1} parent=47 // pred_fallthru
          _
      $region48: #{tpu_custom_call.1} parent=5 // pred_fallthru
        _
      %p690 = scmp.le.s32.totalorder 2, %s17
      // Predicated region
      $region57: #{tpu_custom_call.1} parent=5 // pred_check
        %p691 = pneg %p690
      $region58: #{tpu_custom_call.1} parent=5 // pred_check_branch
        %693 = sbr.rel (%p691) target = $region60
      $region59: #{tpu_custom_call.1} parent=5 // pred_region
        %s694 = ssub.s32 %s17, 2
        // Predicated region
        $region61: #{tpu_custom_call.1} parent=59 // pred_check
          %p695 = pneg %p198
        $region62: #{tpu_custom_call.1} parent=59 // pred_check_branch
          %697 = sbr.rel (%p695) target = $region64
        $region63: #{tpu_custom_call.1} parent=59 // pred_region
          %s698 = sand.u32 %s183, 1
          %s699 = scalar_lea.sflag [#allocation4], %s698
          %s700 = sand.u32 %s183, 1
          %s701 = smul.addr %s700, 16
          %s702 = scalar_lea.vmem [#allocation5], %s701
          %703 = dma.done %s699, 256
        $region64: #{tpu_custom_call.1} parent=59 // pred_fallthru
          _
      $region60: #{tpu_custom_call.1} parent=5 // pred_fallthru
        _
    $region6: #{tpu_custom_call.1} parent=1 // loop_footer
      %s21 = sadd.s32 1, %s17
    $region7: #{tpu_custom_call.1} parent=1 // loop_footer_branch
      %16 = sbr.rel target = $region3
    $region8: #{tpu_custom_call.1} parent=1 // loop_exit
      _
    %704 = vsyncpa [#allocation3], 1
    %s705 = scalar_lea.sflag [#allocation3], 1
    %706 = vsyncpa %s705, 1
    %707 = vsyncpa [#allocation4], 1
    %s708 = scalar_lea.sflag [#allocation4], 1
    %709 = vsyncpa %s708, 1

</llo_original>
